<compile_context>
chip_gen: v7x
topology: tpu7x:2x2x1
jax: 0.10.0
libtpu: 0.0.40
codegen_flags: <defaults>
</compile_context>

<pallas_src>
import functools

import jax
import jax.numpy as jnp
from jax.experimental import pallas as pl
from jax.experimental.pallas import tpu as pltpu


# ---------------------------------------------------------------------------
# Kernels
# ---------------------------------------------------------------------------

def _make_fused_kernel(HW):
    """Single-pass kernel: the whole (C, HW) slab of Bn images per grid step."""
    inv_hw = 1.0 / float(HW)

    def kernel(x_ref, w1t_ref, w2t_ref, o_ref):
        # x_ref:   (Bn, C, HW)   full spatial extent, contiguous per image
        # w1t_ref: (C,  Cr)      fc1 weight, transposed
        # w2t_ref: (Cr, C)       fc2 weight, transposed
        # o_ref:   (Bn, C)
        x = x_ref[...]
        # Lane-combine is VPU adds/maxes; only one cross-lane (XLU) reduce per
        # output row — this is the cheapest place to do the pooling.
        avg = jnp.sum(x, axis=-1, dtype=jnp.float32) * inv_hw          # (Bn, C)
        mx = jnp.max(x, axis=-1).astype(jnp.float32)                   # (Bn, C)

        bn = o_ref.shape[0]
        # Fuse the two MLP passes: stack avg & max rows -> one matmul pair.
        pooled = jnp.concatenate([avg, mx], axis=0)                    # (2*Bn, C)
        w1t = w1t_ref[...].astype(jnp.float32)
        w2t = w2t_ref[...].astype(jnp.float32)
        h = jnp.maximum(
            jnp.dot(pooled, w1t, preferred_element_type=jnp.float32), 0.0)
        y = jnp.dot(h, w2t, preferred_element_type=jnp.float32)        # (2*Bn, C)
        out = y[:bn, :] + y[bn:, :]                                    # avg + max
        o_ref[...] = jax.nn.sigmoid(out).astype(o_ref.dtype)

    return kernel


def _make_split_kernel(HW, T, needs_mask):
    """Fallback: one image per batch block, spatial axis tiled & accumulated."""
    inv_hw = 1.0 / float(HW)

    def kernel(x_ref, w1t_ref, w2t_ref, o_ref, sum_sc, max_sc):
        # x_ref:   (Bn, C, T)   one spatial tile
        # o_ref:   (Bn, C)      resident across the spatial grid axis
        # sum_sc / max_sc: (Bn, C) f32 running accumulators
        hw = pl.program_id(1)
        last = pl.num_programs(1) - 1

        @pl.when(hw == 0)
        def _init():
            sum_sc[...] = jnp.zeros_like(sum_sc)
            max_sc[...] = jnp.full_like(max_sc, -jnp.inf)

        def _accumulate(xs, xm):
            # T is large (>= several 128-lane groups), so the cross-lane
            # reduce here is only ~128/T of the VPU lane-combine work; a
            # (Bn, C, 128) lane-group scratch would not move the bottleneck.
            sum_sc[...] += jnp.sum(xs, axis=-1, dtype=jnp.float32)
            max_sc[...] = jnp.maximum(
                max_sc[...], jnp.max(xm, axis=-1).astype(jnp.float32))

        # Steady-state tiles: no masking at all (the tail mask is gated to the
        # final tile only).
        @pl.when(hw < last)
        def _steady():
            x = x_ref[...]
            _accumulate(x, x)

        @pl.when(hw == last)
        def _tail_and_finalize():
            x = x_ref[...]
            if needs_mask:
                # Only the final tile can contain padding lanes past HW.
                lane = jax.lax.broadcasted_iota(jnp.int32, x.shape, dimension=2)
                valid = (hw * T + lane) < HW
                xs = jnp.where(valid, x, jnp.zeros((), dtype=x.dtype))
                xm = jnp.where(valid, x, jnp.array(-jnp.inf, dtype=x.dtype))
            else:
                xs = x
                xm = x
            _accumulate(xs, xm)

            bn = o_ref.shape[0]
            avg = sum_sc[...] * inv_hw
            mx = max_sc[...]
            pooled = jnp.concatenate([avg, mx], axis=0)                # (2*Bn, C)
            w1t = w1t_ref[...].astype(jnp.float32)
            w2t = w2t_ref[...].astype(jnp.float32)
            h = jnp.maximum(
                jnp.dot(pooled, w1t, preferred_element_type=jnp.float32), 0.0)
            y = jnp.dot(h, w2t, preferred_element_type=jnp.float32)
            out = y[:bn, :] + y[bn:, :]
            o_ref[...] = jax.nn.sigmoid(out).astype(o_ref.dtype)

    return kernel


# ---------------------------------------------------------------------------
# Planning helpers (run at trace time with concrete shapes)
# ---------------------------------------------------------------------------

def _tpu_topology():
    """Best-effort (num_tensorcores, vmem_capacity_bytes) for the local device."""
    vmem_cap = 64 * 1024 * 1024      # conservative default if the query fails
    num_cores = 1
    try:
        info = pltpu.get_tpu_info()
        vmem_cap = int(getattr(info, "vmem_capacity_bytes", vmem_cap))
        for attr in ("num_cores", "num_tensorcores", "core_count"):
            val = getattr(info, attr, None)
            if val:
                num_cores = int(val)
                break
    except Exception:  # pragma: no cover - defensive for unusual backends
        pass
    try:
        kind = jax.devices()[0].device_kind.lower()
        if "v7" in kind:             # v7x: 2 TensorCores per chip
            num_cores = max(num_cores, 2)
    except Exception:  # pragma: no cover
        pass
    return num_cores, vmem_cap


def _choose_tiles(N, C, HW, itemsize, target_block_bytes, num_cores):
    """Pick (Bn, T, split): batch rows per block, spatial tile, split flag."""
    row_bytes = C * HW * itemsize
    if row_bytes <= target_block_bytes or HW <= 128:
        # Preferred path: full spatial extent per block (fully contiguous DMA
        # per image, no tail mask, no per-step accumulator RMW).
        T = HW
        bn = max(1, int(target_block_bytes // max(1, row_bytes)))
        if num_cores >= 2 and N >= 2:
            # Keep at least `num_cores` batch blocks so every TensorCore gets
            # work (v7x).  Single-TC chips (v5e/v6e) skip this cap entirely.
            bn = min(bn, pl.cdiv(N, num_cores))
        Bn = int(min(bn, N))
        if Bn < N and Bn >= 8:
            Bn = (Bn // 8) * 8        # sublane-aligned partial batch blocks
        return Bn, T, False
    # One image's (C, HW) slab exceeds the block budget: stream it in
    # lane-aligned spatial tiles and accumulate sum/max in VMEM scratch.
    T = (target_block_bytes // (C * itemsize)) // 128 * 128
    T = int(max(128, min(T, (HW // 128) * 128)))
    return 1, T, True


# ---------------------------------------------------------------------------
# Public entry point
# ---------------------------------------------------------------------------

@functools.partial(jax.jit, static_argnames=("block_bytes",))
def channel_attention(x, w1, w2, *, block_bytes=None):
    """x: (N, C, H, W); w1: (C//16, C); w2: (C, C//16).

    Returns sigmoid(fc2(relu(fc1(avg_pool(x)))) + fc2(relu(fc1(max_pool(x)))))
    with shape (N, C, 1, 1), matching the PyTorch module.  `block_bytes` is a
    test/tuning hook overriding the x-block byte budget.
    """
    N, C, H, W = x.shape
    Cr = w1.shape[0]
    HW = H * W
    itemsize = jnp.dtype(x.dtype).itemsize

    x_flat = x.reshape(N, C, HW)
    w1t = w1.T  # (C, Cr)
    w2t = w2.T  # (Cr, C)

    num_cores, vmem_cap = _tpu_topology()
    # v7x: 64 MiB VMEM/TC -> 48 MiB limit, ~16 MiB blocks (x2 pipeline bufs).
    # v5e/v6e: 128 MiB VMEM -> 96 MiB limit, ~28 MiB blocks.
    vmem_limit = int(min(100 * 1024 * 1024, (vmem_cap * 3) // 4))
    if block_bytes is None:
        block_bytes = (16 if vmem_cap <= 64 * 1024 * 1024 else 28) * 1024 * 1024

    Bn, T, split = _choose_tiles(N, C, HW, itemsize, block_bytes, num_cores)

    cost = pl.CostEstimate(
        flops=int(2 * N * C * HW + 8 * N * C * Cr),
        transcendentals=int(N * C),
        bytes_accessed=int(N * C * HW * itemsize
                           + 2 * C * Cr * jnp.dtype(w1.dtype).itemsize
                           + N * C * itemsize),
    )

    # NOTE: weights are tiny and constant-indexed; the default double buffer
    # costs at most a couple of MiB even at C=2048, well inside our headroom,
    # so we skip pipeline_mode overrides to keep lowering simple.
    if not split:
        grid = (pl.cdiv(N, Bn),)
        out = pl.pallas_call(
            _make_fused_kernel(HW),
            out_shape=jax.ShapeDtypeStruct((N, C), x.dtype),
            grid_spec=pltpu.PrefetchScalarGridSpec(
                num_scalar_prefetch=0,
                grid=grid,
                in_specs=[
                    pl.BlockSpec((Bn, C, HW), lambda n: (n, 0, 0)),
                    pl.BlockSpec((C, Cr), lambda n: (0, 0)),
                    pl.BlockSpec((Cr, C), lambda n: (0, 0)),
                ],
                out_specs=pl.BlockSpec((Bn, C), lambda n: (n, 0)),
            ),
            compiler_params=pltpu.CompilerParams(
                dimension_semantics=("parallel",),
                vmem_limit_bytes=vmem_limit,
            ),
            cost_estimate=cost,
        )(x_flat, w1t, w2t)
    else:
        needs_mask = (HW % T) != 0
        grid = (pl.cdiv(N, Bn), pl.cdiv(HW, T))
        out = pl.pallas_call(
            _make_split_kernel(HW, T, needs_mask),
            out_shape=jax.ShapeDtypeStruct((N, C), x.dtype),
            grid_spec=pltpu.PrefetchScalarGridSpec(
                num_scalar_prefetch=0,
                grid=grid,
                in_specs=[
                    pl.BlockSpec((Bn, C, T), lambda n, hw: (n, 0, hw)),
                    pl.BlockSpec((C, Cr), lambda n, hw: (0, 0)),
                    pl.BlockSpec((Cr, C), lambda n, hw: (0, 0)),
                ],
                out_specs=pl.BlockSpec((Bn, C), lambda n, hw: (n, 0)),
                scratch_shapes=[
                    pltpu.VMEM((Bn, C), jnp.float32),   # running sum
                    pltpu.VMEM((Bn, C), jnp.float32),   # running max
                ],
            ),
            compiler_params=pltpu.CompilerParams(
                dimension_semantics=("parallel", "arbitrary"),
                vmem_limit_bytes=vmem_limit,
            ),
            cost_estimate=cost,
        )(x_flat, w1t, w2t)

    return out.reshape(N, C, 1, 1)


# ---------------------------------------------------------------------------
# Pure-JAX reference mirroring the PyTorch forward
# ---------------------------------------------------------------------------

def channel_attention_ref(x, w1, w2):
    avg = jnp.mean(x, axis=(2, 3))  # (N, C)
    mx = jnp.max(x, axis=(2, 3))    # (N, C)

    def mlp(p):
        h = jnp.maximum(p @ w1.T, 0.0)
        return h @ w2.T

    out = mlp(avg) + mlp(mx)
    return jax.nn.sigmoid(out)[:, :, None, None]


if __name__ == "__main__":
    key = jax.random.PRNGKey(0)
    kx, k1, k2, kx2 = jax.random.split(key, 4)

    # in_planes must be >= 16 since the module hardcodes in_planes // 16.
    N, C, H, W = 2, 32, 16, 16
    Cr = C // 16

    x = jax.random.normal(kx, (N, C, H, W), dtype=jnp.float32)
    # Conv2d 1x1 (no bias) weights == dense matrices.
    w1 = jax.random.normal(k1, (Cr, C), dtype=jnp.float32) * 0.1
    w2 = jax.random.normal(k2, (C, Cr), dtype=jnp.float32) * 0.1

    out = jax.block_until_ready(channel_attention(x, w1, w2))
    ref = channel_attention_ref(x, w1, w2)
    assert out.shape == (N, C, 1, 1), out.shape
    assert jnp.allclose(out, ref, atol=1e-5, rtol=1e-5), (
        float(jnp.max(jnp.abs(out - ref))))

    # Also exercise the spatial-split fallback (tail mask gated to last tile)
    # by forcing a tiny block budget on a non-128-multiple spatial extent.
    x2 = jax.random.normal(kx2, (N, C, 20, 20), dtype=jnp.float32)
    out2 = jax.block_until_ready(
        channel_attention(x2, w1, w2, block_bytes=32 * 1024))
    ref2 = channel_attention_ref(x2, w1, w2)
    assert jnp.allclose(out2, ref2, atol=1e-5, rtol=1e-5), (
        float(jnp.max(jnp.abs(out2 - ref2))))

    print("KERNEL_OK")
</pallas_src>

<mosaic_0001>
module attributes {stable_mosaic.version = 11 : i64} {
  func.func @kernel(%arg0: i32, %arg1: memref<2x32x256xf32, #tpu.memory_space<vmem>>, %arg2: memref<32x2xf32, #tpu.memory_space<vmem>>, %arg3: memref<2x32xf32, #tpu.memory_space<vmem>>, %arg4: memref<2x32xf32, #tpu.memory_space<vmem>>) attributes {dimension_semantics = [#tpu.dimension_semantics<parallel>], iteration_bounds = array<i64: 1>, scalar_prefetch = 0 : i64, scratch_operands = 0 : i64, tpu.core_type = #tpu.core_type<tc>, window_params = [{transform_indices = @transform_0, window_bounds = array<i64: 2, 32, 256>}, {pipeline_mode = #tpu.pipeline_mode<synchronous>, transform_indices = @transform_1, window_bounds = array<i64: 32, 2>}, {pipeline_mode = #tpu.pipeline_mode<synchronous>, transform_indices = @transform_2, window_bounds = array<i64: 2, 32>}, {transform_indices = @transform_3, window_bounds = array<i64: 2, 32>}]} {
    %c0 = arith.constant 0 : index
    %c0_0 = arith.constant 0 : index
    %c0_1 = arith.constant 0 : index
    %0 = vector.load %arg1[%c0, %c0_0, %c0_1] : memref<2x32x256xf32, #tpu.memory_space<vmem>>, vector<2x32x256xf32>
    %cst = arith.constant dense<0.000000e+00> : vector<2x32xf32>
    %1 = vector.multi_reduction <add>, %0, %cst [2] : vector<2x32x256xf32> to vector<2x32xf32>
    %cst_2 = arith.constant 3.906250e-03 : f32
    %2 = vector.broadcast %cst_2 : f32 to vector<2x32xf32>
    %3 = arith.mulf %1, %2 : vector<2x32xf32>
    %cst_3 = arith.constant dense<0xFF800000> : vector<2x32xf32>
    %4 = vector.multi_reduction <maximumf>, %0, %cst_3 [2] : vector<2x32x256xf32> to vector<2x32xf32>
    %5 = tpu.concatenate %3, %4 in 0 : vector<2x32xf32>, vector<2x32xf32> -> vector<4x32xf32>
    %c0_4 = arith.constant 0 : index
    %c0_5 = arith.constant 0 : index
    %6 = vector.load %arg2[%c0_4, %c0_5] : memref<32x2xf32, #tpu.memory_space<vmem>>, vector<32x2xf32>
    %c0_6 = arith.constant 0 : index
    %c0_7 = arith.constant 0 : index
    %7 = vector.load %arg3[%c0_6, %c0_7] : memref<2x32xf32, #tpu.memory_space<vmem>>, vector<2x32xf32>
    %cst_8 = arith.constant dense<0.000000e+00> : vector<4x2xf32>
    %8 = tpu.matmul %5, %6, %cst_8 {dimension_numbers = #tpu.dot_dimension_numbers<[1], [0], [0], [1], [0, 0, 1, 1], [], []>} : vector<4x32xf32>, vector<32x2xf32>, vector<4x2xf32> -> vector<4x2xf32>
    %cst_9 = arith.constant 0.000000e+00 : f32
    %9 = vector.broadcast %cst_9 : f32 to vector<4x2xf32>
    %10 = arith.maximumf %8, %9 : vector<4x2xf32>
    %cst_10 = arith.constant dense<0.000000e+00> : vector<4x32xf32>
    %11 = tpu.matmul %10, %7, %cst_10 {dimension_numbers = #tpu.dot_dimension_numbers<[1], [0], [0], [1], [0, 0, 1, 1], [], []>} : vector<4x2xf32>, vector<2x32xf32>, vector<4x32xf32> -> vector<4x32xf32>
    %12 = vector.extract_strided_slice %11 {offsets = [0, 0], sizes = [2, 32], strides = [1, 1]} : vector<4x32xf32> to vector<2x32xf32>
    %13 = vector.extract_strided_slice %11 {offsets = [2, 0], sizes = [2, 32], strides = [1, 1]} : vector<4x32xf32> to vector<2x32xf32>
    %14 = arith.addf %12, %13 : vector<2x32xf32>
    %15 = arith.negf %14 : vector<2x32xf32>
    %16 = math.exp %15 : vector<2x32xf32>
    %cst_11 = arith.constant 1.000000e+00 : f32
    %17 = vector.broadcast %cst_11 : f32 to vector<2x32xf32>
    %18 = arith.addf %17, %16 : vector<2x32xf32>
    %19 = arith.divf %17, %18 : vector<2x32xf32>
    %c0_12 = arith.constant 0 : index
    %c0_13 = arith.constant 0 : index
    %20 = vector.load %arg4[%c0_12, %c0_13] : memref<2x32xf32, #tpu.memory_space<vmem>>, vector<2x32xf32>
    tpu.vector_store %arg4[%c0_12, %c0_13], %19 {strides = array<i32>} : memref<2x32xf32, #tpu.memory_space<vmem>>, vector<2x32xf32>,
    return
  }
  func.func @transform_0(%arg0: i32) -> (i32, i32, i32) {
    %c0_i32 = arith.constant 0 : i32
    %c0_i32_0 = arith.constant 0 : i32
    %c0_i32_1 = arith.constant 0 : i32
    return %arg0, %c0_i32, %c0_i32_0 : i32, i32, i32
  }
  func.func @transform_1(%arg0: i32) -> (i32, i32) {
    %c0_i32 = arith.constant 0 : i32
    %c0_i32_0 = arith.constant 0 : i32
    %c0_i32_1 = arith.constant 0 : i32
    return %c0_i32, %c0_i32_0 : i32, i32
  }
  func.func @transform_2(%arg0: i32) -> (i32, i32) {
    %c0_i32 = arith.constant 0 : i32
    %c0_i32_0 = arith.constant 0 : i32
    %c0_i32_1 = arith.constant 0 : i32
    return %c0_i32, %c0_i32_0 : i32, i32
  }
  func.func @transform_3(%arg0: i32) -> (i32, i32) {
    %c0_i32 = arith.constant 0 : i32
    %c0_i32_0 = arith.constant 0 : i32
    return %arg0, %c0_i32 : i32, i32
  }
}

</mosaic_0001>

<llo_original>
// kernel: channel_attention.1
$region0: #{channel_attention.1}
  #allocation0 [shape = 'u32[]', space=smem, size = 0x4, offset = 0x4, fixed_abs, tag = 'smem constant byte address 0x4 - core index']
  #allocation1 [shape = 'u32[144,128]{1,0:T(1,128)}', space=vmem, size = 0x12000, scoped, tag = 'internal scratch']
  %s0 = inlined_call_operand.vmem [shape: f32[2,32,256], index: 0, kind: input, shape index: {}]
  %s1 = inlined_call_operand.vmem [shape: f32[32,2], index: 1, kind: input, shape index: {}]
  %s2 = inlined_call_operand.vmem [shape: f32[2,32], index: 2, kind: input, shape index: {}]
  %s3 = inlined_call_operand.hbm [shape: f32[2,32], index: 3, kind: output, shape index: {}]
  %s4 = sld [smem:[#allocation0]]
  $region22: #{channel_attention.1} parent=0
    _
  %s6 = ssub.s32 1, %s4
  %s7 = scalar_select 0, %s6, %s4
  $region1: #{channel_attention.1} parent=0
    #allocation2 [shape = 'u8[1024]{0}', space=vmem, size = 0x400, scoped, tag = 'output window, operand 0, single buffered']
    #allocation3 [shape = 's32[1]{0}', space=sflag, size = 0x4, scoped, tag = 'scoped memory for channel_attention.1']
    %8 = vsyncpa [#allocation3], 0
    // Predicated region
    $region2: #{channel_attention.1} parent=1 // pred_check
      _
    $region3: #{channel_attention.1} parent=1 // pred_check_branch
      %10 = sbr.rel (0) target = $region5
    $region4: #{channel_attention.1} parent=1 // pred_region
      _
    $region5: #{channel_attention.1} parent=1 // pred_fallthru
      _
    // Predicated region
    $region6: #{channel_attention.1} parent=1 // pred_check
      _
    $region7: #{channel_attention.1} parent=1 // pred_check_branch
      %12 = sbr.rel (0) target = $region9
    $region8: #{channel_attention.1} parent=1 // pred_region
      _
    $region9: #{channel_attention.1} parent=1 // pred_fallthru
      _
    // Predicated region
    $region10: #{channel_attention.1} parent=1 // pred_check
      _
    $region11: #{channel_attention.1} parent=1 // pred_check_branch
      %14 = sbr.rel (0) target = $region13
    $region12: #{channel_attention.1} parent=1 // pred_region
      _
    $region13: #{channel_attention.1} parent=1 // pred_fallthru
      _
    %v15 = vld [vmem:[%s0] sm:$0xff]
    %v16 = vld [vmem:[%s0 + $0x8] sm:$0xff]
    %v17 = vld [vmem:[%s0 + $0x10] sm:$0xff]
    %v18 = vld [vmem:[%s0 + $0x18] sm:$0xff]
    %v19 = vld [vmem:[%s0 + $0x20] sm:$0xff]
    %v20 = vld [vmem:[%s0 + $0x28] sm:$0xff]
    %v21 = vld [vmem:[%s0 + $0x30] sm:$0xff]
    %v22 = vld [vmem:[%s0 + $0x38] sm:$0xff]
    %v23 = vld [vmem:[%s0 + $0x40] sm:$0xff]
    %v24 = vld [vmem:[%s0 + $0x48] sm:$0xff]
    %v25 = vld [vmem:[%s0 + $0x50] sm:$0xff]
    %v26 = vld [vmem:[%s0 + $0x58] sm:$0xff]
    %v27 = vld [vmem:[%s0 + $0x60] sm:$0xff]
    %v28 = vld [vmem:[%s0 + $0x68] sm:$0xff]
    %v29 = vld [vmem:[%s0 + $0x70] sm:$0xff]
    %v30 = vld [vmem:[%s0 + $0x78] sm:$0xff]
    %v31 = vadd.f32 %v15, %v16
    %32 = vadd.xlane.f32.xlu0 %v31
    %v33 = vpop.xlane.xlu0 %32
    %v34 = vadd.f32 %v17, %v18
    %35 = vadd.xlane.f32.xlu0 %v34
    %v36 = vpop.xlane.xlu0 %35
    %v37 = vadd.f32 %v19, %v20
    %38 = vadd.xlane.f32.xlu0 %v37
    %v39 = vpop.xlane.xlu0 %38
    %v40 = vadd.f32 %v21, %v22
    %41 = vadd.xlane.f32.xlu0 %v40
    %v42 = vpop.xlane.xlu0 %41
    %v43 = vadd.f32 %v23, %v24
    %44 = vadd.xlane.f32.xlu0 %v43
    %v45 = vpop.xlane.xlu0 %44
    %v46 = vadd.f32 %v25, %v26
    %47 = vadd.xlane.f32.xlu0 %v46
    %v48 = vpop.xlane.xlu0 %47
    %v49 = vadd.f32 %v27, %v28
    %50 = vadd.xlane.f32.xlu0 %v49
    %v51 = vpop.xlane.xlu0 %50
    %v52 = vadd.f32 %v29, %v30
    %53 = vadd.xlane.f32.xlu0 %v52
    %v54 = vpop.xlane.xlu0 %53
    %v55 = vmul.f32 %v33, 0.00390625
    %v56 = vmul.f32 %v36, 0.00390625
    %v57 = vmul.f32 %v39, 0.00390625
    %v58 = vmul.f32 %v42, 0.00390625
    %v59 = vmul.f32 %v45, 0.00390625
    %v60 = vmul.f32 %v48, 0.00390625
    %v61 = vmul.f32 %v51, 0.00390625
    %v62 = vmul.f32 %v54, 0.00390625
    %v63 = vmax.f32 %v15, %v16
    %64 = vmax.xlane.f32.xlu0 %v63
    %v65 = vpop.xlane.xlu0 %64
    %v66 = vmax.f32 %v17, %v18
    %67 = vmax.xlane.f32.xlu0 %v66
    %v68 = vpop.xlane.xlu0 %67
    %v69 = vmax.f32 %v19, %v20
    %70 = vmax.xlane.f32.xlu0 %v69
    %v71 = vpop.xlane.xlu0 %70
    %v72 = vmax.f32 %v21, %v22
    %73 = vmax.xlane.f32.xlu0 %v72
    %v74 = vpop.xlane.xlu0 %73
    %v75 = vmax.f32 %v23, %v24
    %76 = vmax.xlane.f32.xlu0 %v75
    %v77 = vpop.xlane.xlu0 %76
    %v78 = vmax.f32 %v25, %v26
    %79 = vmax.xlane.f32.xlu0 %v78
    %v80 = vpop.xlane.xlu0 %79
    %v81 = vmax.f32 %v27, %v28
    %82 = vmax.xlane.f32.xlu0 %v81
    %v83 = vpop.xlane.xlu0 %82
    %v84 = vmax.f32 %v29, %v30
    %85 = vmax.xlane.f32.xlu0 %v84
    %v86 = vpop.xlane.xlu0 %85
    %v95 = vlaneseq
    %v96 = vand.u32 %v95, 127
    %v97 = vlaneseq
    %v98 = vshrl.u32 %v97, 7
    %v99 = vsub.s32 %v96, %v98
    %v100 = vrot.slane %v55, %v99
    %v101 = vadd.s32 %v96, 4294967288
    %v102 = vlaneseq
    %v103 = vshrl.u32 %v102, 7
    %v104 = vsub.s32 %v101, %v103
    %v105 = vrot.slane %v56, %v104
    %vm106 = vcmask 130112
    %v107 = vsel %vm106, %v105, %v100
    %v108 = vadd.s32 %v96, 4294967280
    %v109 = vlaneseq
    %v110 = vshrl.u32 %v109, 7
    %v111 = vsub.s32 %v108, %v110
    %v112 = vrot.slane %v57, %v111
    %vm113 = vcmask 195712
    %v114 = vsel %vm113, %v112, %v107
    %v115 = vadd.s32 %v96, 4294967272
    %v116 = vlaneseq
    %v117 = vshrl.u32 %v116, 7
    %v118 = vsub.s32 %v115, %v117
    %v119 = vrot.slane %v58, %v118
    %vm120 = vcmask 261312
    %v121 = vsel %vm120, %v119, %v114
    %v122 = vlaneseq
    %v123 = vshrl.u32 %v122, 7
    %v124 = vsub.s32 %v96, %v123
    %v125 = vrot.slane %v59, %v124
    %v126 = vlaneseq
    %v127 = vshrl.u32 %v126, 7
    %v128 = vsub.s32 %v101, %v127
    %v129 = vrot.slane %v60, %v128
    %v130 = vsel %vm106, %v129, %v125
    %v131 = vlaneseq
    %v132 = vshrl.u32 %v131, 7
    %v133 = vsub.s32 %v108, %v132
    %v134 = vrot.slane %v61, %v133
    %v135 = vsel %vm113, %v134, %v130
    %v136 = vlaneseq
    %v137 = vshrl.u32 %v136, 7
    %v138 = vsub.s32 %v115, %v137
    %v139 = vrot.slane %v62, %v138
    %v140 = vsel %vm120, %v139, %v135
    %vm141 = vcmask 1041409
    %v142 = vsel %vm141, %v140, %v121
    %v152 = vlaneseq
    %v153 = vshrl.u32 %v152, 7
    %v154 = vsub.s32 %v96, %v153
    %v155 = vrot.slane %v65, %v154
    %v156 = vlaneseq
    %v157 = vshrl.u32 %v156, 7
    %v158 = vsub.s32 %v101, %v157
    %v159 = vrot.slane %v68, %v158
    %v160 = vsel %vm106, %v159, %v155
    %v161 = vlaneseq
    %v162 = vshrl.u32 %v161, 7
    %v163 = vsub.s32 %v108, %v162
    %v164 = vrot.slane %v71, %v163
    %v165 = vsel %vm113, %v164, %v160
    %v166 = vlaneseq
    %v167 = vshrl.u32 %v166, 7
    %v168 = vsub.s32 %v115, %v167
    %v169 = vrot.slane %v74, %v168
    %v170 = vsel %vm120, %v169, %v165
    %v171 = vlaneseq
    %v172 = vshrl.u32 %v171, 7
    %v173 = vsub.s32 %v96, %v172
    %v174 = vrot.slane %v77, %v173
    %v175 = vlaneseq
    %v176 = vshrl.u32 %v175, 7
    %v177 = vsub.s32 %v101, %v176
    %v178 = vrot.slane %v80, %v177
    %v179 = vsel %vm106, %v178, %v174
    %v180 = vlaneseq
    %v181 = vshrl.u32 %v180, 7
    %v182 = vsub.s32 %v108, %v181
    %v183 = vrot.slane %v83, %v182
    %v184 = vsel %vm113, %v183, %v179
    %v185 = vlaneseq
    %v186 = vshrl.u32 %v185, 7
    %v187 = vsub.s32 %v115, %v186
    %v188 = vrot.slane %v86, %v187
    %v189 = vsel %vm120, %v188, %v184
    %vm190 = vcmask 1043459
    %v191 = vsel %vm190, %v189, %v170
    %vm193 = vcmask 1041408
    %v194 = vsel %vm193, %v142, %v191
    %v195 = vld [vmem:[%s1] sm:$0xff]
    %v196 = vld [vmem:[%s1 + $0x8] sm:$0xff]
    %v197 = vld [vmem:[%s1 + $0x10] sm:$0xff]
    %v198 = vld [vmem:[%s1 + $0x18] sm:$0xff]
    %v199 = vld [vmem:[%s2] sm:$0x3]
    %vm200 = vcmask 261120
    %v202 = vsel %vm200, %v194, 0
    %204 = vmatprep.subr.mxu0 0.0
    %205 = vmatpush1.msra.mxu0 %v195
    %206 = vmatprep.subr.mxu0 0.0
    %207 = vmatpush1.msra.mxu0 %v196
    %208 = vmatprep.subr.mxu0 0.0
    %209 = vmatpush1.msra.mxu0 %v197
    %210 = vmatprep.subr.mxu0 0.0
    %211 = vmatpush1.msra.mxu0 %v198
    %212 = vmatprep.subr.mxu0 0.0
    %213 = vmatpush1.msra.mxu0 0.0
    %214 = vmatprep.subr.mxu0 0.0
    %215 = vmatpush1.msra.mxu0 0.0
    %216 = vmatprep.subr.mxu0 0.0
    %217 = vmatpush1.msra.mxu0 0.0
    %218 = vmatprep.subr.mxu0 0.0
    %219 = vmatpush1.msra.mxu0 0.0
    %220 = vmatprep.subr.mxu0 0.0
    %221 = vmatpush1.msra.mxu0 0.0
    %222 = vmatprep.subr.mxu0 0.0
    %223 = vmatpush1.msra.mxu0 0.0
    %224 = vmatprep.subr.mxu0 0.0
    %225 = vmatpush1.msra.mxu0 0.0
    %226 = vmatprep.subr.mxu0 0.0
    %227 = vmatpush1.msra.mxu0 0.0
    %228 = vmatprep.subr.mxu0 0.0
    %229 = vmatpush1.msra.mxu0 0.0
    %230 = vmatprep.subr.mxu0 0.0
    %231 = vmatpush1.msra.mxu0 0.0
    %232 = vmatprep.subr.mxu0 0.0
    %233 = vmatpush1.msra.mxu0 0.0
    %234 = vmatprep.subr.mxu0 0.0
    %235 = vmatpush1.msra.mxu0 0.0
    %236 = vmatprep.subr.mxu0 0.0
    %237 = vmatpush1.msra.mxu0 0.0
    %238 = vmatprep.subr.mxu0 0.0
    %239 = vmatpush1.msra.mxu0 0.0
    %240 = vmatprep.subr.mxu0 0.0
    %241 = vmatpush1.msra.mxu0 0.0
    %242 = vmatprep.subr.mxu0 0.0
    %243 = vmatpush1.msra.mxu0 0.0
    %244 = vmatprep.subr.mxu0 0.0
    %245 = vmatpush1.msra.mxu0 0.0
    %246 = vmatprep.subr.mxu0 0.0
    %247 = vmatpush1.msra.mxu0 0.0
    %248 = vmatprep.subr.mxu0 0.0
    %249 = vmatpush1.msra.mxu0 0.0
    %250 = vmatprep.subr.mxu0 0.0
    %251 = vmatpush1.msra.mxu0 0.0
    %252 = vmatprep.subr.mxu0 0.0
    %253 = vmatpush1.msra.mxu0 0.0
    %254 = vmatprep.subr.mxu0 0.0
    %255 = vmatpush1.msra.mxu0 0.0
    %256 = vmatprep.subr.mxu0 0.0
    %257 = vmatpush1.msra.mxu0 0.0
    %258 = vmatprep.subr.mxu0 0.0
    %259 = vmatpush1.msra.mxu0 0.0
    %260 = vmatprep.subr.mxu0 0.0
    %261 = vmatpush1.msra.mxu0 0.0
    %262 = vmatprep.subr.mxu0 0.0
    %263 = vmatpush1.msra.mxu0 0.0
    %264 = vmatprep.subr.mxu0 0.0
    %265 = vmatpush1.msra.mxu0 0.0
    %266 = vmatprep.subr.mxu0 0.0
    %267 = vmatpush1.msra.mxu0 0.0
    %268 = vmatprep.mubr.f32.mxu0 0.0
    %269 = vmatmul.mubr.f32.gmra.mrb[0].mxu0 %v202
    %v270 = vpop.f32.mrb[0].mxu0
    %v271 = vadd.f32 0.0, %v270
    %v272 = vpop.f32.mrb[0].mxu0
    %273 = vdwg.mxu0
    %v274 = vmax.f32 %v271, 0.0
    %vm275 = vcmask 15360
    %v277 = vsel %vm275, %v274, 0
    %v280 = vsel %vm193, %v199, 0
    %282 = vmatprep.subr.mxu0 0.0
    %283 = vmatpush1.msra.mxu0 %v280
    %284 = vmatprep.subr.mxu0 0.0
    %285 = vmatpush1.msra.mxu0 0.0
    %286 = vmatprep.subr.mxu0 0.0
    %287 = vmatpush1.msra.mxu0 0.0
    %288 = vmatprep.subr.mxu0 0.0
    %289 = vmatpush1.msra.mxu0 0.0
    %290 = vmatprep.subr.mxu0 0.0
    %291 = vmatpush1.msra.mxu0 0.0
    %292 = vmatprep.subr.mxu0 0.0
    %293 = vmatpush1.msra.mxu0 0.0
    %294 = vmatprep.subr.mxu0 0.0
    %295 = vmatpush1.msra.mxu0 0.0
    %296 = vmatprep.subr.mxu0 0.0
    %297 = vmatpush1.msra.mxu0 0.0
    %298 = vmatprep.subr.mxu0 0.0
    %299 = vmatpush1.msra.mxu0 0.0
    %300 = vmatprep.subr.mxu0 0.0
    %301 = vmatpush1.msra.mxu0 0.0
    %302 = vmatprep.subr.mxu0 0.0
    %303 = vmatpush1.msra.mxu0 0.0
    %304 = vmatprep.subr.mxu0 0.0
    %305 = vmatpush1.msra.mxu0 0.0
    %306 = vmatprep.subr.mxu0 0.0
    %307 = vmatpush1.msra.mxu0 0.0
    %308 = vmatprep.subr.mxu0 0.0
    %309 = vmatpush1.msra.mxu0 0.0
    %310 = vmatprep.subr.mxu0 0.0
    %311 = vmatpush1.msra.mxu0 0.0
    %312 = vmatprep.subr.mxu0 0.0
    %313 = vmatpush1.msra.mxu0 0.0
    %314 = vmatprep.subr.mxu0 0.0
    %315 = vmatpush1.msra.mxu0 0.0
    %316 = vmatprep.subr.mxu0 0.0
    %317 = vmatpush1.msra.mxu0 0.0
    %318 = vmatprep.subr.mxu0 0.0
    %319 = vmatpush1.msra.mxu0 0.0
    %320 = vmatprep.subr.mxu0 0.0
    %321 = vmatpush1.msra.mxu0 0.0
    %322 = vmatprep.subr.mxu0 0.0
    %323 = vmatpush1.msra.mxu0 0.0
    %324 = vmatprep.subr.mxu0 0.0
    %325 = vmatpush1.msra.mxu0 0.0
    %326 = vmatprep.subr.mxu0 0.0
    %327 = vmatpush1.msra.mxu0 0.0
    %328 = vmatprep.subr.mxu0 0.0
    %329 = vmatpush1.msra.mxu0 0.0
    %330 = vmatprep.subr.mxu0 0.0
    %331 = vmatpush1.msra.mxu0 0.0
    %332 = vmatprep.subr.mxu0 0.0
    %333 = vmatpush1.msra.mxu0 0.0
    %334 = vmatprep.subr.mxu0 0.0
    %335 = vmatpush1.msra.mxu0 0.0
    %336 = vmatprep.subr.mxu0 0.0
    %337 = vmatpush1.msra.mxu0 0.0
    %338 = vmatprep.subr.mxu0 0.0
    %339 = vmatpush1.msra.mxu0 0.0
    %340 = vmatprep.subr.mxu0 0.0
    %341 = vmatpush1.msra.mxu0 0.0
    %342 = vmatprep.subr.mxu0 0.0
    %343 = vmatpush1.msra.mxu0 0.0
    %344 = vmatprep.subr.mxu0 0.0
    %345 = vmatpush1.msra.mxu0 0.0
    %346 = vmatprep.mubr.f32.mxu0 0.0
    %347 = vmatmul.mubr.f32.gmra.mrb[0].mxu0 %v277
    %v348 = vpop.f32.mrb[0].mxu0
    %v349 = vadd.f32 0.0, %v348
    %v350 = vpop.f32.mrb[0].mxu0
    %351 = vdwg.mxu0
    %v353 = vrot.slane %v349, 2
    %v355 = vadd.f32 %v349, %v353
    %v356 = vxor.u32 %v355, 2147483648
    %v357 = vmul.f32 %v356, 1.442695
    %v358 = vpow.pop %v357
    %v359 = vadd.f32 %v358, 1.0
    %v360 = vrcp.pop %v359
    %v361 = vmul.f32 1.0, %v360
    %vm362 = vcmask 254976
    %363 = vst.msk [vmem:[#allocation2] sm:$0x3] %vm362, %v361
    // Predicated region
    $region14: #{channel_attention.1} parent=1 // pred_check
      _
    $region15: #{channel_attention.1} parent=1 // pred_check_branch
      %365 = sbr.rel (0) target = $region17
    $region16: #{channel_attention.1} parent=1 // pred_region
      %s367 = ssub.s32 32, 32
      %368 = vsyncadd [#allocation3], %s367
      %s370 = sshll.u32 [#allocation2], 4
      %s371 = int_to_ptr.vmem [resolvable:$true] %s370
      %373 = dma.vmem_to_hbm [thread:$0]  %s371, 32, %s3, [#allocation3]
    $region17: #{channel_attention.1} parent=1 // pred_fallthru
      _
    // Predicated region
    $region18: #{channel_attention.1} parent=1 // pred_check
      _
    $region19: #{channel_attention.1} parent=1 // pred_check_branch
      %375 = sbr.rel (0) target = $region21
    $region20: #{channel_attention.1} parent=1 // pred_region
      %376 = dma.done [#allocation3], 32
    $region21: #{channel_attention.1} parent=1 // pred_fallthru
      _
    %377 = vsyncpa [#allocation3], 1

</llo_original>
